<compile_context>
chip_gen: v6e
topology: v6e:2x2x1
jax: 0.10.0
libtpu: 0.0.40
codegen_flags: <defaults>
</compile_context>

<pallas_src>
import math
import functools

import jax
import jax.numpy as jnp
from jax.experimental import pallas as pl
from jax.experimental.pallas import tpu as pltpu


# --------------------------------------------------------------------------------------
# Generation-aware compiler params
# --------------------------------------------------------------------------------------
def _detect_vmem_limit():
    try:
        cap = getattr(pltpu.get_tpu_info(), "vmem_capacity_bytes", None)
        if cap is not None:
            if cap <= 80 * 1024 * 1024:          # v7x-class core (64 MiB physical)
                return 44 * 1024 * 1024
            return 96 * 1024 * 1024              # v5e / v6e (128 MiB physical)
    except Exception:
        pass
    return 64 * 1024 * 1024


_VMEM_LIMIT = _detect_vmem_limit()


def _cp(*semantics):
    return pltpu.CompilerParams(dimension_semantics=tuple(semantics),
                                vmem_limit_bytes=_VMEM_LIMIT)


# --------------------------------------------------------------------------------------
# Tile-size helpers (budgets scale with the VMEM limit)
# --------------------------------------------------------------------------------------
def _choose_tile(m, max_tile=512):
    for t in (8192, 4096, 2048, 1024, 512, 256, 128, 64, 32, 16, 8):
        if t <= max_tile and m % t == 0:
            return t
    # fallback: full-dim block (always legal; only hit for tiny / odd m)
    return m


def _mm_tile(M, K, N):
    budget = int(0.4 * _VMEM_LIMIT)
    per_row = 4 * 2 * (K + N)                    # f32 in + out blocks, double-buffered
    return _choose_tile(M, max(8, min(8192, budget // max(per_row, 1))))


def _conv_tile(N, n, sk):
    budget = int(0.35 * _VMEM_LIMIT)
    sk_pad = max(128, -(-sk // 128) * 128)
    # bf16 feat_support block (x2 buffers) + f32 dir_norm block (128-lane padded, x2)
    # + f32 theta / act temporaries
    per_point = n * (2 * 2 * sk_pad + 2 * 4 * 128 + 2 * 4 * sk_pad) + 16 * sk_pad
    return _choose_tile(N, max(8, budget // max(per_point, 1)))


def _lane_tile(N):
    for t in (512, 256, 128):
        if N % t == 0:
            return t
    return N


# --------------------------------------------------------------------------------------
# Pallas kernel 1: generic y = act(x @ w + b)      (bf16 MXU operands, f32 accumulation)
# Used for: Conv_layer feature projection, conv_down Linear layers.
# --------------------------------------------------------------------------------------
def _mm_kernel(x_ref, w_ref, b_ref, o_ref, *, act):
    y = jnp.dot(x_ref[...].astype(jnp.bfloat16), w_ref[...],
                preferred_element_type=jnp.float32)
    y = y + b_ref[...]
    if act == "relu":
        y = jnp.maximum(y, 0.0)
    o_ref[...] = y


def matmul_bias(x, w, b=None, act="none"):
    M, K = x.shape
    K2, N = w.shape
    assert K == K2
    if b is None:
        b = jnp.zeros((N,), jnp.float32)
    b2 = b.reshape(1, N).astype(jnp.float32)
    tm = _mm_tile(M, K, N)
    return pl.pallas_call(
        functools.partial(_mm_kernel, act=act),
        out_shape=jax.ShapeDtypeStruct((M, N), jnp.float32),
        grid_spec=pltpu.PrefetchScalarGridSpec(
            num_scalar_prefetch=0, grid=(M // tm,),
            in_specs=[pl.BlockSpec((tm, K), lambda i: (i, 0)),
                      pl.BlockSpec((K, N), lambda i: (0, 0)),
                      pl.BlockSpec((1, N), lambda i: (0, 0))],
            out_specs=pl.BlockSpec((tm, N), lambda i: (i, 0))),
        compiler_params=_cp("parallel"),
    )(x.astype(jnp.float32), w.astype(jnp.bfloat16), b2)


# --------------------------------------------------------------------------------------
# Pallas kernel 2: pairwise squared distances (lane-dense (3, N) inputs, row-tiled out)
# --------------------------------------------------------------------------------------
def _sqdist_kernel(a_ref, b_ref, o_ref):
    a = a_ref[0]                                              # (3, tr)
    b = b_ref[0]                                              # (3, M)
    inner = jax.lax.dot_general(a, b, (((0,), (0,)), ((), ())),
                                preferred_element_type=jnp.float32)       # (tr, M)
    ones3 = jnp.ones((a.shape[0], 1), jnp.float32)
    an = jax.lax.dot_general(a * a, ones3, (((0,), (0,)), ((), ())),
                             preferred_element_type=jnp.float32)          # (tr, 1)
    bn = jnp.sum(b * b, axis=0, keepdims=True)                # (1, M)
    o_ref[0] = -2.0 * inner + an + bn


def pairwise_sqdist(a, b):
    bs, N, _ = a.shape
    M = b.shape[1]
    a_t = jnp.transpose(a, (0, 2, 1)).astype(jnp.float32)     # (bs, 3, N)
    b_t = jnp.transpose(b, (0, 2, 1)).astype(jnp.float32)     # (bs, 3, M)
    tr = _lane_tile(N)
    return pl.pallas_call(
        _sqdist_kernel,
        out_shape=jax.ShapeDtypeStruct((bs, N, M), jnp.float32),
        grid_spec=pltpu.PrefetchScalarGridSpec(
            num_scalar_prefetch=0, grid=(bs, N // tr),
            in_specs=[pl.BlockSpec((1, 3, tr), lambda bb, i: (bb, 0, i)),
                      pl.BlockSpec((1, 3, M), lambda bb, i: (bb, 0, 0))],
            out_specs=pl.BlockSpec((1, tr, M), lambda bb, i: (bb, i, 0))),
        compiler_params=_cp("parallel", "parallel"),
    )(a_t, b_t)


# --------------------------------------------------------------------------------------
# Pallas kernel 3: Conv_surface, fused theta projection + max/sum + BN + ReLU, N-tiled
# --------------------------------------------------------------------------------------
def _conv_surface_kernel(dn_ref, dirs_ref, sc_ref, sh_ref, o_ref, *, s, k):
    sk = s * k
    dn = dn_ref[0]                                            # (tN, n, 3) f32
    dirs = dirs_ref[...]                                      # (3, s*k)
    d0 = jnp.reshape(dirs[0:1, :], (1, 1, sk))
    d1 = jnp.reshape(dirs[1:2, :], (1, 1, sk))
    d2 = jnp.reshape(dirs[2:3, :], (1, 1, sk))
    th = dn[:, :, 0:1] * d0 + dn[:, :, 1:2] * d1 + dn[:, :, 2:3] * d2
    th = jnp.maximum(th, 0.0)                                 # (tN, n, s*k)
    total = jnp.max(th[:, :, 0:k], axis=1)
    for si in range(1, s):
        total = total + jnp.max(th[:, :, si * k:(si + 1) * k], axis=1)
    o_ref[0] = jnp.maximum(total * sc_ref[...] + sh_ref[...], 0.0)


def conv_surface_fuse(dir_norm, directions, bn_scale, bn_shift, s, k):
    bs, N, n, _ = dir_norm.shape
    sk = s * k
    tN = _conv_tile(N, n, sk)
    sc = bn_scale.reshape(1, k)
    sh = bn_shift.reshape(1, k)
    return pl.pallas_call(
        functools.partial(_conv_surface_kernel, s=s, k=k),
        out_shape=jax.ShapeDtypeStruct((bs, N, k), jnp.float32),
        grid_spec=pltpu.PrefetchScalarGridSpec(
            num_scalar_prefetch=0, grid=(bs, N // tN),
            in_specs=[pl.BlockSpec((1, tN, n, 3), lambda b, i: (b, i, 0, 0)),
                      pl.BlockSpec((3, sk), lambda b, i: (0, 0)),
                      pl.BlockSpec((1, k), lambda b, i: (0, 0)),
                      pl.BlockSpec((1, k), lambda b, i: (0, 0))],
            out_specs=pl.BlockSpec((1, tN, k), lambda b, i: (b, i, 0))),
        compiler_params=_cp("parallel", "parallel"),
    )(dir_norm, directions, sc, sh)


# --------------------------------------------------------------------------------------
# Pallas kernel 4: Conv_layer, fused theta projection * neighbor feats + max/sum +
#                  center add + BN + ReLU, N-tiled; feat_support streamed as bf16.
# --------------------------------------------------------------------------------------
def _conv_layer_kernel(dn_ref, fs_ref, fc_ref, dirs_ref, sc_ref, sh_ref, o_ref,
                       *, s, cout):
    sk = s * cout
    dn = dn_ref[0]                                            # (tN, n, 3) f32
    fs = fs_ref[0].astype(jnp.float32)                        # (tN, n, s*cout)
    dirs = dirs_ref[...]                                      # (3, s*cout)
    d0 = jnp.reshape(dirs[0:1, :], (1, 1, sk))
    d1 = jnp.reshape(dirs[1:2, :], (1, 1, sk))
    d2 = jnp.reshape(dirs[2:3, :], (1, 1, sk))
    th = dn[:, :, 0:1] * d0 + dn[:, :, 1:2] * d1 + dn[:, :, 2:3] * d2
    th = jnp.maximum(th, 0.0)
    act = th * fs                                             # (tN, n, s*cout)
    total = jnp.max(act[:, :, 0:cout], axis=1)
    for si in range(1, s):
        total = total + jnp.max(act[:, :, si * cout:(si + 1) * cout], axis=1)
    fuse = fc_ref[0] + total
    o_ref[0] = jnp.maximum(fuse * sc_ref[...] + sh_ref[...], 0.0)


def conv_layer_fuse(dir_norm, directions, feat_support, feat_center,
                    bn_scale, bn_shift, s, cout):
    bs, N, n, _ = dir_norm.shape
    sk = s * cout
    tN = _conv_tile(N, n, sk)
    sc = bn_scale.reshape(1, cout)
    sh = bn_shift.reshape(1, cout)
    return pl.pallas_call(
        functools.partial(_conv_layer_kernel, s=s, cout=cout),
        out_shape=jax.ShapeDtypeStruct((bs, N, cout), jnp.float32),
        grid_spec=pltpu.PrefetchScalarGridSpec(
            num_scalar_prefetch=0, grid=(bs, N // tN),
            in_specs=[pl.BlockSpec((1, tN, n, 3), lambda b, i: (b, i, 0, 0)),
                      pl.BlockSpec((1, tN, n, sk), lambda b, i: (b, i, 0, 0)),
                      pl.BlockSpec((1, tN, cout), lambda b, i: (b, i, 0)),
                      pl.BlockSpec((3, sk), lambda b, i: (0, 0)),
                      pl.BlockSpec((1, cout), lambda b, i: (0, 0)),
                      pl.BlockSpec((1, cout), lambda b, i: (0, 0))],
            out_specs=pl.BlockSpec((1, tN, cout), lambda b, i: (b, i, 0))),
        compiler_params=_cp("parallel", "parallel"),
    )(dir_norm, feat_support, feat_center, directions, sc, sh)


# --------------------------------------------------------------------------------------
# Pallas kernel 5: TransformerBlock attention (channels-last, row-tiled accumulation)
# with the position-encoding MLP and fused q/v projection computed in the prologue.
# --------------------------------------------------------------------------------------
def _attention_kernel(x_ref, xyz_ref, fc1w_ref, fc1b_ref, fc2w_ref, fc2b_ref,
                      wqv_ref, bv_ref, wt_ref, bt_ref, sc_ref, sh_ref, o_ref,
                      xp_s, q_s, v_s, num_s, cs_s, *, tr, C):
    ki = pl.program_id(1)
    nk = pl.num_programs(1)

    @pl.when(ki == 0)
    def _():
        # position encoding: fc_delta(xyz - mean) fused (fc1 as 3 VPU FMAs, fc2 on MXU)
        xyz = xyz_ref[0]                                        # (N, 3)
        xyz_c = xyz - jnp.mean(xyz, axis=0, keepdims=True)
        w1 = fc1w_ref[...]                                      # (3, C)
        h = (xyz_c[:, 0:1] * w1[0:1, :] + xyz_c[:, 1:2] * w1[1:2, :]
             + xyz_c[:, 2:3] * w1[2:3, :] + fc1b_ref[...])
        h = jnp.maximum(h, 0.0)
        pe = jnp.dot(h.astype(jnp.bfloat16), fc2w_ref[...],
                     preferred_element_type=jnp.float32) + fc2b_ref[...]
        xp = x_ref[0] + pe                                      # (N, C)
        xp_s[...] = xp
        # fused q/v projection: one (N, 2C) matmul, sliced in VMEM
        qv = jnp.dot(xp.astype(jnp.bfloat16), wqv_ref[...],
                     preferred_element_type=jnp.float32)
        q_s[...] = qv[:, :C].astype(jnp.bfloat16)
        v_s[...] = (qv[:, C:] + bv_ref[...]).astype(jnp.bfloat16)
        num_s[...] = jnp.zeros_like(num_s)
        cs_s[...] = jnp.zeros_like(cs_s)

    start = ki * tr
    if tr % 8 == 0:
        start = pl.multiple_of(start, 8)
    rows = pl.ds(start, tr)
    q_rows = q_s[rows, :]                                       # (tr, C) bf16
    energy = jax.lax.dot_general(q_rows, q_s[...], (((1,), (1,)), ((), ())),
                                 preferred_element_type=jnp.float32)       # (tr, N)
    m = jnp.max(energy, axis=-1, keepdims=True)
    e = jnp.exp(energy - m)
    rs = jnp.sum(e, axis=-1, keepdims=True)
    attn = e * pl.reciprocal(rs, approx=True)                   # row softmax
    ones_tr = jnp.ones((tr, 1), jnp.float32)
    cs_s[...] += jax.lax.dot_general(attn, ones_tr, (((0,), (0,)), ((), ())),
                                     preferred_element_type=jnp.float32)   # (N, 1)
    num_s[...] += jax.lax.dot_general(attn.astype(jnp.bfloat16), v_s[rows, :],
                                      (((0,), (0,)), ((), ())),
                                      preferred_element_type=jnp.float32)  # (N, C)

    @pl.when(ki == nk - 1)
    def _():
        x_r = num_s[...] / (cs_s[...] + 1e-9)                   # exact division
        t = jnp.dot((xp_s[...] - x_r).astype(jnp.bfloat16), wt_ref[...],
                    preferred_element_type=jnp.float32) + bt_ref[...]
        t = jnp.maximum(t * sc_ref[...] + sh_ref[...], 0.0)     # BN (eval) + ReLU
        o_ref[0] = x_ref[0] + t                                 # pre + residual


def transformer_forward(p, xyz, x):
    bs, N, C = x.shape
    tr = _choose_tile(N, 256)
    wqv = jnp.concatenate([p["wq"], p["wv"]], axis=1).astype(jnp.bfloat16)   # (C, 2C)
    wt = p["wt"].astype(jnp.bfloat16)
    fc2w = p["fc2_w"].astype(jnp.bfloat16)
    fc1w = p["fc1_w"].astype(jnp.float32)
    fc1b = p["fc1_b"].reshape(1, C)
    fc2b = p["fc2_b"].reshape(1, C)
    bv = p["bv"].reshape(1, C)
    bt = p["bt"].reshape(1, C)
    sc = p["bn"]["scale"].reshape(1, C)
    sh = p["bn"]["shift"].reshape(1, C)
    return pl.pallas_call(
        functools.partial(_attention_kernel, tr=tr, C=C),
        out_shape=jax.ShapeDtypeStruct((bs, N, C), jnp.float32),
        grid_spec=pltpu.PrefetchScalarGridSpec(
            num_scalar_prefetch=0, grid=(bs, N // tr),
            in_specs=[pl.BlockSpec((1, N, C), lambda b, i: (b, 0, 0)),    # x
                      pl.BlockSpec((1, N, 3), lambda b, i: (b, 0, 0)),    # xyz
                      pl.BlockSpec((3, C), lambda b, i: (0, 0)),          # fc1_w
                      pl.BlockSpec((1, C), lambda b, i: (0, 0)),          # fc1_b
                      pl.BlockSpec((C, C), lambda b, i: (0, 0)),          # fc2_w
                      pl.BlockSpec((1, C), lambda b, i: (0, 0)),          # fc2_b
                      pl.BlockSpec((C, 2 * C), lambda b, i: (0, 0)),      # [wq|wv]
                      pl.BlockSpec((1, C), lambda b, i: (0, 0)),          # bv
                      pl.BlockSpec((C, C), lambda b, i: (0, 0)),          # wt
                      pl.BlockSpec((1, C), lambda b, i: (0, 0)),          # bt
                      pl.BlockSpec((1, C), lambda b, i: (0, 0)),          # bn scale
                      pl.BlockSpec((1, C), lambda b, i: (0, 0))],         # bn shift
            out_specs=pl.BlockSpec((1, N, C), lambda b, i: (b, 0, 0)),
            scratch_shapes=[pltpu.VMEM((N, C), jnp.float32),     # xp
                            pltpu.VMEM((N, C), jnp.bfloat16),    # q (== k)
                            pltpu.VMEM((N, C), jnp.bfloat16),    # v
                            pltpu.VMEM((N, C), jnp.float32),     # num accumulator
                            pltpu.VMEM((N, 1), jnp.float32)]),   # column sums
        compiler_params=_cp("parallel", "arbitrary"),
    )(x, xyz, fc1w, fc1b, fc2w, fc2b, wqv, bv, wt, bt, sc, sh)


# --------------------------------------------------------------------------------------
# Pallas kernel 6: segmentation head with split w1 (fm_fuse never materialized),
# N-tiled, lane-dense class-padded output, in-kernel f32 log-softmax.
# --------------------------------------------------------------------------------------
def _head_kernel(f0, f1, f2, f3, f4, fg, w1, b1, w2, b2, w3, b3, o_ref, *, offs):
    h = jnp.dot(f0[0].astype(jnp.bfloat16), w1[offs[0]:offs[1], :],
                preferred_element_type=jnp.float32)
    for p_ref, lo, hi in ((f1, offs[1], offs[2]), (f2, offs[2], offs[3]),
                          (f3, offs[3], offs[4]), (f4, offs[4], offs[5])):
        h = h + jnp.dot(p_ref[0].astype(jnp.bfloat16), w1[lo:hi, :],
                        preferred_element_type=jnp.float32)
    hg = jnp.dot(fg[0].astype(jnp.bfloat16), w1[offs[5]:offs[6], :],
                 preferred_element_type=jnp.float32)             # (1, h1) per-batch term
    h = jnp.maximum(h + hg + b1[...], 0.0)
    h = jnp.maximum(jnp.dot(h.astype(jnp.bfloat16), w2[...],
                            preferred_element_type=jnp.float32) + b2[...], 0.0)
    logits = jnp.dot(h.astype(jnp.bfloat16), w3[...],
                     preferred_element_type=jnp.float32) + b3[...]
    mx = jnp.max(logits, axis=-1, keepdims=True)
    lse = mx + jnp.log(jnp.sum(jnp.exp(logits - mx), axis=-1, keepdims=True))
    o_ref[0] = logits - lse


def head_forward(p, parts, fg_oh):
    assert len(parts) == 5
    bs, N, _ = parts[0].shape
    widths = [int(t.shape[-1]) for t in parts] + [int(fg_oh.shape[-1])]
    offs = [0]
    for w in widths:
        offs.append(offs[-1] + w)
    D = offs[-1]
    assert p["w1"].shape[0] == D, (p["w1"].shape, D)
    h1 = p["w1"].shape[1]
    h2 = p["w2"].shape[1]
    cls = p["w3"].shape[1]
    cls_pad = max(128, -(-cls // 128) * 128)
    w3 = p["w3"]
    b3 = p["b3"]
    if cls_pad != cls:
        # padded classes: zero weights + -1e30 bias (f32) so exp underflows to 0 and the
        # log_softmax over real classes is unchanged; padding is sliced off below.
        w3 = jnp.pad(w3, ((0, 0), (0, cls_pad - cls)))
        b3 = jnp.pad(b3, ((0, cls_pad - cls),), constant_values=-1e30)
    w1b = p["w1"].astype(jnp.bfloat16)
    w2b = p["w2"].astype(jnp.bfloat16)
    w3b = w3.astype(jnp.bfloat16)
    b1 = p["b1"].reshape(1, h1).astype(jnp.float32)
    b2 = p["b2"].reshape(1, h2).astype(jnp.float32)
    b3r = b3.reshape(1, cls_pad).astype(jnp.float32)
    tN = _choose_tile(N, 256)
    Dg = widths[-1]

    in_specs = [pl.BlockSpec((1, tN, c), lambda b, i: (b, i, 0)) for c in widths[:-1]]
    in_specs.append(pl.BlockSpec((1, 1, Dg), lambda b, i: (b, 0, 0)))
    in_specs += [pl.BlockSpec((D, h1), lambda b, i: (0, 0)),
                 pl.BlockSpec((1, h1), lambda b, i: (0, 0)),
                 pl.BlockSpec((h1, h2), lambda b, i: (0, 0)),
                 pl.BlockSpec((1, h2), lambda b, i: (0, 0)),
                 pl.BlockSpec((h2, cls_pad), lambda b, i: (0, 0)),
                 pl.BlockSpec((1, cls_pad), lambda b, i: (0, 0))]

    out = pl.pallas_call(
        functools.partial(_head_kernel, offs=tuple(offs)),
        out_shape=jax.ShapeDtypeStruct((bs, N, cls_pad), jnp.float32),
        grid_spec=pltpu.PrefetchScalarGridSpec(
            num_scalar_prefetch=0, grid=(bs, N // tN),
            in_specs=in_specs,
            out_specs=pl.BlockSpec((1, tN, cls_pad), lambda b, i: (b, i, 0))),
        compiler_params=_cp("parallel", "parallel"),
    )(*parts, fg_oh, w1b, b1, w2b, b2, w3b, b3r)
    return out[:, :, :cls]


# --------------------------------------------------------------------------------------
# gcn3d helper ops (glue: gathers / top-k / argmin done in plain JAX)
# --------------------------------------------------------------------------------------
def get_neighbor_index(vertices, neighbor_num):
    N = vertices.shape[1]
    k = min(neighbor_num, N - 1)
    dist = pairwise_sqdist(vertices, vertices)
    _, idx = jax.lax.top_k(-dist, k + 1)             # smallest distances
    return idx[:, :, 1:]                              # drop self


def get_dual_neighbor_index(vertices, nl, ng):
    """One pairwise-distance kernel + one top_k, sliced for both neighbor counts."""
    N = vertices.shape[1]
    kl = min(nl, N - 1)
    kg = min(ng, N - 1)
    kmax = max(kl, kg)
    dist = pairwise_sqdist(vertices, vertices)
    _, idx = jax.lax.top_k(-dist, kmax + 1)
    idx = idx[:, :, 1:]
    return idx[:, :, :kl], idx[:, :, :kg]


def get_nearest_index(target, source):
    dist = pairwise_sqdist(target, source)
    return jnp.argmin(dist, axis=-1)[..., None]       # (bs, N, 1)


def indexing_neighbor(tensor, index):
    return jax.vmap(lambda t, i: t[i])(tensor, index)


def get_neighbor_direction_norm(vertices, neighbor_index):
    neighbors = indexing_neighbor(vertices, neighbor_index)     # (bs, N, n, 3)
    nd = neighbors - vertices[:, :, None, :]
    norm = jnp.sqrt(jnp.sum(nd * nd, axis=-1, keepdims=True))
    return nd / jnp.maximum(norm, 1e-12)


def _normalize_cols(d):
    norm = jnp.sqrt(jnp.sum(d * d, axis=0, keepdims=True))
    return d / jnp.maximum(norm, 1e-12)


def conv_surface_forward(p, bn, neighbor_index, vertices):
    s, k = p["support_num"], p["kernel_num"]
    dir_norm = get_neighbor_direction_norm(vertices, neighbor_index)
    dirs = _normalize_cols(p["directions"])
    return conv_surface_fuse(dir_norm, dirs, bn["scale"], bn["shift"], s, k)


def conv_layer_forward(p, bn, neighbor_index, vertices, feature_map):
    bs, N, n = neighbor_index.shape
    s, cout = p["support_num"], p["out_channel"]
    dir_norm = get_neighbor_direction_norm(vertices, neighbor_index)
    dirs = _normalize_cols(p["directions"])
    feat_out = matmul_bias(feature_map.reshape(bs * N, -1), p["weights"], p["bias"])
    feat_out = feat_out.reshape(bs, N, (s + 1) * cout)
    feat_center = feat_out[:, :, :cout]
    # TODO(synk): replace this XLA gather with an in-kernel DMA gather (scalar-prefetched
    #             neighbor indices); for now the neighbor features are streamed as bf16
    #             so both the gather write and the conv-kernel read are halved.
    feat_support = indexing_neighbor(feat_out[:, :, cout:].astype(jnp.bfloat16),
                                     neighbor_index)
    return conv_layer_fuse(dir_norm, dirs, feat_support, feat_center,
                           bn["scale"], bn["shift"], s, cout)


def gcn_fusion_surface_forward(p, vertices):
    ni_l, ni_g = get_dual_neighbor_index(vertices, p["nl"], p["ng"])
    fm_l = conv_surface_forward(p["conv_l"], p["bn_l"], ni_l, vertices)
    fm_g = conv_surface_forward(p["conv_g0"], p["bn_g0"], ni_g, vertices)
    fm_g = conv_layer_forward(p["conv_g1"], p["bn_g1"], ni_g, vertices, fm_g)
    return jnp.concatenate([fm_l, fm_g], axis=2)


def gcn_fusion_forward(p, vertices, feat):
    ni_l, ni_g = get_dual_neighbor_index(vertices, p["nl"], p["ng"])
    fm_l = conv_layer_forward(p["conv_l"], p["bn_l"], ni_l, vertices, feat)
    fm_g = conv_layer_forward(p["conv_g0"], p["bn_g0"], ni_g, vertices, feat)
    fm_g = conv_layer_forward(p["conv_g1"], p["bn_g1"], ni_g, vertices, fm_g)
    return jnp.concatenate([fm_l, fm_g], axis=2)


def pool_layer_forward(vertices, feature_map, pooling_rate, neighbor_num, key):
    bs, N, _ = vertices.shape
    ni = get_neighbor_index(vertices, neighbor_num)
    nf = indexing_neighbor(feature_map, ni)
    pooled = jnp.max(nf, axis=2)
    pool_num = N // pooling_rate
    sample_idx = jax.random.permutation(key, N)[:pool_num]
    return vertices[:, sample_idx, :], pooled[:, sample_idx, :]


def linear_relu(p, x):
    bs, N, D = x.shape
    y = matmul_bias(x.reshape(bs * N, D), p["w"], p["b"], act="relu")
    return y.reshape(bs, N, -1)


# --------------------------------------------------------------------------------------
# GCN3D forward
# --------------------------------------------------------------------------------------
def gcn3d_forward(params, vertices_b3n, onehot):
    vertices = jnp.transpose(vertices_b3n, (0, 2, 1))            # (bs, N, 3)
    bs, N, _ = vertices.shape

    fm_0 = gcn_fusion_surface_forward(params["conv_0"], vertices)        # (bs,N,256)
    fm_0 = linear_relu(params["conv_down0"], fm_0)                       # (bs,N,128)
    fm_0 = transformer_forward(params["att0"], vertices, fm_0)

    fm_1 = gcn_fusion_forward(params["conv_1"], vertices, fm_0)          # (bs,N,256)
    fm_1 = linear_relu(params["conv_down1"], fm_1)                       # (bs,N,128)
    fm_1 = transformer_forward(params["att1"], vertices, fm_1)

    v_pool_1, fm_pool_1 = pool_layer_forward(vertices, fm_1, 4, 4, params["pool_key1"])
    fm_2 = gcn_fusion_forward(params["conv_2"], v_pool_1, fm_pool_1)     # (bs,N/4,256)
    fm_2 = transformer_forward(params["att2"], v_pool_1, fm_2)
    fm_3 = gcn_fusion_forward(params["conv_3"], v_pool_1, fm_2)          # (bs,N/4,512)
    fm_3 = transformer_forward(params["att3"], v_pool_1, fm_3)

    v_pool_2, fm_pool_2 = pool_layer_forward(v_pool_1, fm_3, 4, 4, params["pool_key2"])
    fm_4 = gcn_fusion_forward(params["conv_4"], v_pool_2, fm_pool_2)     # (bs,N/16,1024)
    fm_4 = linear_relu(params["conv_down2"], fm_4)                       # (bs,N/16,512)
    fm_4 = transformer_forward(params["att4"], v_pool_2, fm_4)

    f_global = jnp.max(fm_4, axis=1)                                     # (bs, 512)

    nearest_pool_1 = get_nearest_index(vertices, v_pool_1)
    nearest_pool_2 = get_nearest_index(vertices, v_pool_2)
    fm_2u = indexing_neighbor(fm_2, nearest_pool_1)[:, :, 0, :]
    fm_3u = indexing_neighbor(fm_3, nearest_pool_1)[:, :, 0, :]
    fm_4u = indexing_neighbor(fm_4, nearest_pool_2)[:, :, 0, :]

    # fm_fuse is never materialized: the head consumes the parts + a per-batch
    # (f_global | onehot) row and accumulates partial matmuls against row-slices of w1.
    fg_oh = jnp.concatenate([f_global, onehot], axis=1)[:, None, :]      # (bs, 1, 528)
    parts = [fm_0, fm_1, fm_2u, fm_3u, fm_4u]
    return head_forward(params["head"], parts, fg_oh)                    # log_softmax


# --------------------------------------------------------------------------------------
# Deterministic parameter initialization
# (linear-style weights stored in "x @ W" orientation; random init so orientation of the
#  uniform init is immaterial, but the forward math matches the Conv1d/Linear reference)
# --------------------------------------------------------------------------------------
class KeyGen:
    def __init__(self, seed=0):
        self.key = jax.random.PRNGKey(seed)

    def __call__(self):
        self.key, sub = jax.random.split(self.key)
        return sub


def _uniform(key, shape, scale):
    return jax.random.uniform(key, shape, jnp.float32, minval=-scale, maxval=scale)


def init_params(kg, class_num, support_num, cat_num=16):
    def conv_surface_p(k_num):
        stdv = 1.0 / math.sqrt(support_num * k_num)
        return {"directions": _uniform(kg(), (3, support_num * k_num), stdv),
                "support_num": support_num, "kernel_num": k_num}

    def conv_layer_p(cin, cout):
        stdv = 1.0 / math.sqrt(cout * (support_num + 1))
        return {"weights": _uniform(kg(), (cin, (support_num + 1) * cout), stdv),
                "bias": _uniform(kg(), ((support_num + 1) * cout,), stdv),
                "directions": _uniform(kg(), (3, support_num * cout), stdv),
                "support_num": support_num, "out_channel": cout}

    def bn_p(c):
        eps = 1e-5
        gamma = jnp.ones((c,), jnp.float32)
        beta = jnp.zeros((c,), jnp.float32)
        rm = jnp.zeros((c,), jnp.float32)
        rv = jnp.ones((c,), jnp.float32)
        scale = gamma / jnp.sqrt(rv + eps)
        return {"scale": scale, "shift": beta - rm * scale}

    def fusion_surface_p(dim):
        return {"nl": 10, "ng": 100,
                "conv_l": conv_surface_p(dim), "conv_g0": conv_surface_p(dim),
                "conv_g1": conv_layer_p(dim, dim),
                "bn_l": bn_p(dim), "bn_g0": bn_p(dim), "bn_g1": bn_p(dim)}

    def fusion_p(dim):
        return {"nl": 10, "ng": 100,
                "conv_l": conv_layer_p(dim, dim), "conv_g0": conv_layer_p(dim, dim),
                "conv_g1": conv_layer_p(dim, dim),
                "bn_l": bn_p(dim), "bn_g0": bn_p(dim), "bn_g1": bn_p(dim)}

    def linear_p(cin, cout):
        s = 1.0 / math.sqrt(cin)
        return {"w": _uniform(kg(), (cin, cout), s), "b": _uniform(kg(), (cout,), s)}

    def transformer_p(c):
        s = 1.0 / math.sqrt(c)
        s3 = 1.0 / math.sqrt(3)
        return {"wq": _uniform(kg(), (c, c), s),
                "wv": _uniform(kg(), (c, c), s), "bv": _uniform(kg(), (c,), s),
                "wt": _uniform(kg(), (c, c), s), "bt": _uniform(kg(), (c,), s),
                "fc1_w": _uniform(kg(), (3, c), s3), "fc1_b": _uniform(kg(), (c,), s3),
                "fc2_w": _uniform(kg(), (c, c), s), "fc2_b": _uniform(kg(), (c,), s),
                "bn": bn_p(c)}

    dim_fuse = 128 + 128 + 256 + 512 + 512 + 512 + cat_num
    return {
        "conv_0": fusion_surface_p(128),
        "conv_1": fusion_p(128),
        "conv_2": fusion_p(128),
        "conv_3": fusion_p(256),
        "conv_4": fusion_p(512),
        "conv_down0": linear_p(256, 128),
        "conv_down1": linear_p(256, 128),
        "conv_down2": linear_p(1024, 512),
        "att0": transformer_p(128), "att1": transformer_p(128),
        "att2": transformer_p(256), "att3": transformer_p(512), "att4": transformer_p(512),
        "head": {"w1": _uniform(kg(), (dim_fuse, 512), 1.0 / math.sqrt(dim_fuse)),
                 "b1": _uniform(kg(), (512,), 1.0 / math.sqrt(dim_fuse)),
                 "w2": _uniform(kg(), (512, 512), 1.0 / math.sqrt(512)),
                 "b2": _uniform(kg(), (512,), 1.0 / math.sqrt(512)),
                 "w3": _uniform(kg(), (512, class_num), 1.0 / math.sqrt(512)),
                 "b3": _uniform(kg(), (class_num,), 1.0 / math.sqrt(512))},
        "pool_key1": jax.random.PRNGKey(101),
        "pool_key2": jax.random.PRNGKey(202),
    }


if __name__ == "__main__":
    class_num, support_num = 8, 1
    bs, N, cat_num = 2, 64, 16

    key = jax.random.PRNGKey(0)
    kv, _ = jax.random.split(key)
    vertices = jax.random.normal(kv, (bs, 3, N), jnp.float32)    # module transposes to (bs,N,3)
    onehot = jax.nn.one_hot(jnp.array([0, 3]), cat_num, dtype=jnp.float32)

    params = init_params(KeyGen(42), class_num, support_num, cat_num)

    pred = gcn3d_forward(params, vertices, onehot)
    pred = jax.block_until_ready(pred)

    assert pred.shape == (bs, N, class_num), pred.shape
    assert bool(jnp.all(jnp.isfinite(pred)))
    print("KERNEL_OK")
</pallas_src>

<mosaic_0001>
module attributes {stable_mosaic.version = 11 : i64} {
  func.func @_sqdist_kernel(%arg0: i32, %arg1: i32, %arg2: memref<1x3x64xf32, #tpu.memory_space<vmem>>, %arg3: memref<1x3x64xf32, #tpu.memory_space<vmem>>, %arg4: memref<1x64x64xf32, #tpu.memory_space<vmem>>) attributes {dimension_semantics = [#tpu.dimension_semantics<parallel>, #tpu.dimension_semantics<parallel>], iteration_bounds = array<i64: 2, 1>, scalar_prefetch = 0 : i64, scratch_operands = 0 : i64, tpu.core_type = #tpu.core_type<tc>, window_params = [{transform_indices = @transform_0, window_bounds = array<i64: 1, 3, 64>}, {transform_indices = @transform_1, window_bounds = array<i64: 1, 3, 64>}, {transform_indices = @transform_2, window_bounds = array<i64: 1, 64, 64>}]} {
    %c0 = arith.constant 0 : index
    %c0_0 = arith.constant 0 : index
    %c0_1 = arith.constant 0 : index
    %0 = vector.load %arg2[%c0, %c0_0, %c0_1] : memref<1x3x64xf32, #tpu.memory_space<vmem>>, vector<1x3x64xf32>
    %1 = vector.shape_cast %0 : vector<1x3x64xf32> to vector<3x64xf32>
    %c0_2 = arith.constant 0 : index
    %c0_3 = arith.constant 0 : index
    %c0_4 = arith.constant 0 : index
    %2 = vector.load %arg3[%c0_2, %c0_3, %c0_4] : memref<1x3x64xf32, #tpu.memory_space<vmem>>, vector<1x3x64xf32>
    %3 = vector.shape_cast %2 : vector<1x3x64xf32> to vector<3x64xf32>
    %cst = arith.constant dense<0.000000e+00> : vector<64x64xf32>
    %4 = tpu.matmul %1, %3, %cst {dimension_numbers = #tpu.dot_dimension_numbers<[0], [0], [1], [1], [0, 1, 1, 1], [], []>} : vector<3x64xf32>, vector<3x64xf32>, vector<64x64xf32> -> vector<64x64xf32>
    %cst_5 = arith.constant 1.000000e+00 : f32
    %5 = vector.broadcast %cst_5 : f32 to vector<3x1xf32>
    %6 = arith.mulf %1, %1 : vector<3x64xf32>
    %cst_6 = arith.constant dense<0.000000e+00> : vector<64x1xf32>
    %7 = tpu.matmul %6, %5, %cst_6 {dimension_numbers = #tpu.dot_dimension_numbers<[0], [0], [1], [1], [0, 1, 1, 1], [], []>} : vector<3x64xf32>, vector<3x1xf32>, vector<64x1xf32> -> vector<64x1xf32>
    %8 = arith.mulf %3, %3 : vector<3x64xf32>
    %cst_7 = arith.constant dense<0.000000e+00> : vector<64xf32>
    %9 = vector.multi_reduction <add>, %8, %cst_7 [0] : vector<3x64xf32> to vector<64xf32>
    %10 = vector.shape_cast %9 : vector<64xf32> to vector<1x64xf32>
    %cst_8 = arith.constant -2.000000e+00 : f32
    %11 = vector.broadcast %cst_8 : f32 to vector<64x64xf32>
    %12 = arith.mulf %11, %4 : vector<64x64xf32>
    %13 = vector.broadcast %7 : vector<64x1xf32> to vector<64x64xf32>
    %14 = arith.addf %12, %13 : vector<64x64xf32>
    %15 = vector.broadcast %10 : vector<1x64xf32> to vector<64x64xf32>
    %16 = arith.addf %14, %15 : vector<64x64xf32>
    %c0_9 = arith.constant 0 : index
    %c0_10 = arith.constant 0 : index
    %c0_11 = arith.constant 0 : index
    %17 = vector.load %arg4[%c0_9, %c0_10, %c0_11] : memref<1x64x64xf32, #tpu.memory_space<vmem>>, vector<1x64x64xf32>
    %18 = vector.shape_cast %17 : vector<1x64x64xf32> to vector<64x64xf32>
    %19 = vector.shape_cast %16 : vector<64x64xf32> to vector<1x64x64xf32>
    tpu.vector_store %arg4[%c0_9, %c0_10, %c0_11], %19 {strides = array<i32>} : memref<1x64x64xf32, #tpu.memory_space<vmem>>, vector<1x64x64xf32>,
    return
  }
  func.func @transform_0(%arg0: i32, %arg1: i32) -> (i32, i32, i32) {
    %c0_i32 = arith.constant 0 : i32
    %c0_i32_0 = arith.constant 0 : i32
    return %arg0, %c0_i32, %arg1 : i32, i32, i32
  }
  func.func @transform_1(%arg0: i32, %arg1: i32) -> (i32, i32, i32) {
    %c0_i32 = arith.constant 0 : i32
    %c0_i32_0 = arith.constant 0 : i32
    %c0_i32_1 = arith.constant 0 : i32
    return %arg0, %c0_i32, %c0_i32_0 : i32, i32, i32
  }
  func.func @transform_2(%arg0: i32, %arg1: i32) -> (i32, i32, i32) {
    %c0_i32 = arith.constant 0 : i32
    %c0_i32_0 = arith.constant 0 : i32
    return %arg0, %arg1, %c0_i32 : i32, i32, i32
  }
}

</mosaic_0001>

<llo_original>
// kernel: tpu_custom_call.1
$region0: #{tpu_custom_call.1}
  #allocation0 [shape = 'u32[]', space=smem, size = 0x4, offset = 0x4, fixed_abs, tag = 'smem constant byte address 0x4 - core index']
  #allocation1 [shape = 'u32[144,128]{1,0:T(1,128)}', space=vmem, size = 0x12000, scoped, tag = 'internal scratch']
  %s0 = inlined_call_operand.vmem [shape: f32[2,3,64], index: 0, kind: input, shape index: {}]
  %s1 = inlined_call_operand.vmem [shape: f32[2,3,64], index: 1, kind: input, shape index: {}]
  %s2 = inlined_call_operand.hbm [shape: f32[2,64,64], index: 2, kind: output, shape index: {}]
  %s3 = sld [smem:[#allocation0]]
  $region41: #{tpu_custom_call.1} parent=0
    _
  %s5 = ssub.s32 1, %s3
  %s6 = scalar_select 0, %s5, %s3
  $region1: #{tpu_custom_call.1} parent=0
    #allocation2 [shape = 'u8[65536]{0}', space=vmem, size = 0x10000, scoped, tag = 'output window, operand 0']
    #allocation3 [shape = 's32[2]{0}', space=sflag, size = 0x8, scoped, tag = 'scoped memory for tpu_custom_call.1']
    %7 = vsyncpa [#allocation3], 0
    %s8 = scalar_lea.sflag [#allocation3], 1
    %9 = vsyncpa %s8, 0
    loop: start=0, step=1, limit=4
    $region2: #{tpu_custom_call.1} parent=1 // loop_pre_header
      _
    $region3: #{tpu_custom_call.1} parent=1 // loop_header
      %s11 = sphi 0, %s15
      %p12 = scmp.ge.s32.totalorder %s11, 4
      %s18 = sphi 0, %s30
      %s19 = sphi 0, %s26
      %s20 = sphi 0, %s18
      %s21 = sphi 0, %s19
      %s22 = sphi 0, %s20
      %s23 = sphi 0, %s21
      %s35 = sphi 0, %s37
      %s38 = sphi 0, %s35
      %s39 = sphi 0, %s38
      %s55 = sphi 0, %s39
      %s61 = sphi 0, %s63
      %s64 = sphi 0, %s61
      %s65 = sphi 0, %s64
      %s81 = sphi 0, %s65
      %s89 = sphi 0, %s91
      %s92 = sphi 0, %s89
      %s93 = sphi 0, %s92
      %s109 = sphi 0, %s93
    $region4: #{tpu_custom_call.1} parent=1 // loop_header_branch
      %14 = sbr.rel (%p12) target = $region8
    $region5: #{tpu_custom_call.1} parent=1 // loop_body
      %s16 = ssub.s32 %s11, 1
      %s17 = ssub.s32 %s11, 2
      %s24 = sadd.s32 1, %s19
      %p25 = scmp.ge.s32.totalorder %s24, 1
      %s26 = scalar_select %p25, 0, %s24
      %s27 = sadd.s32 1, %s18
      %s28 = scalar_select %p25, %s27, %s18
      %p29 = scmp.ge.s32.totalorder %s28, 2
      %s30 = scalar_select %p29, 0, %s28
      %s31 = ssub.s32 %s18, %s30
      %s32 = ssub.s32 %s19, %s26
      %s33 = sor.u32 %s31, %s32
      %p34 = scmp.eq.s32.totalorder %s33, 0
      %s36 = sadd.s32 %s35, 1
      %s37 = scalar_select %p34, %s35, %s36
      %p40 = pneg %p34
      %p41 = scmp.eq.s32.totalorder %s11, 1
      %p42 = por %p40, %p41
      %p43 = scmp.ne.s32.totalorder %s35, %s38
      %p44 = scmp.eq.s32.totalorder %s11, 0
      %p45 = por %p43, %p44
      %p46 = scmp.ne.s32.totalorder %s35, %s38
      %p47 = scmp.eq.s32.totalorder %s16, 1
      %p48 = por %p46, %p47
      %p49 = scmp.ne.s32.totalorder %s38, %s39
      %p50 = scmp.eq.s32.totalorder %s16, 0
      %p51 = por %p49, %p50
      %p52 = scmp.ne.s32.totalorder %s38, %s39
      %p53 = scmp.eq.s32.totalorder %s17, 1
      %p54 = por %p52, %p53
      %p56 = scmp.ne.s32.totalorder %s39, %s55
      %p57 = scmp.eq.s32.totalorder %s17, 0
      %p58 = por %p56, %p57
      %s59 = ssub.s32 %s18, %s30
      %p60 = scmp.eq.s32.totalorder %s59, 0
      %s62 = sadd.s32 %s61, 1
      %s63 = scalar_select %p60, %s61, %s62
      %p66 = pneg %p60
      %p67 = scmp.eq.s32.totalorder %s11, 1
      %p68 = por %p66, %p67
      %p69 = scmp.ne.s32.totalorder %s61, %s64
      %p70 = scmp.eq.s32.totalorder %s11, 0
      %p71 = por %p69, %p70
      %p72 = scmp.ne.s32.totalorder %s61, %s64
      %p73 = scmp.eq.s32.totalorder %s16, 1
      %p74 = por %p72, %p73
      %p75 = scmp.ne.s32.totalorder %s64, %s65
      %p76 = scmp.eq.s32.totalorder %s16, 0
      %p77 = por %p75, %p76
      %p78 = scmp.ne.s32.totalorder %s64, %s65
      %p79 = scmp.eq.s32.totalorder %s17, 1
      %p80 = por %p78, %p79
      %p82 = scmp.ne.s32.totalorder %s65, %s81
      %p83 = scmp.eq.s32.totalorder %s17, 0
      %p84 = por %p82, %p83
      %s85 = ssub.s32 %s18, %s30
      %s86 = ssub.s32 %s19, %s26
      %s87 = sor.u32 %s85, %s86
      %p88 = scmp.eq.s32.totalorder %s87, 0
      %s90 = sadd.s32 %s89, 1
      %s91 = scalar_select %p88, %s89, %s90
      %p94 = pneg %p88
      %p95 = scmp.eq.s32.totalorder %s11, 1
      %p96 = por %p94, %p95
      %p97 = scmp.ne.s32.totalorder %s89, %s92
      %p98 = scmp.eq.s32.totalorder %s11, 0
      %p99 = por %p97, %p98
      %p100 = scmp.ne.s32.totalorder %s89, %s92
      %p101 = scmp.eq.s32.totalorder %s16, 1
      %p102 = por %p100, %p101
      %p103 = scmp.ne.s32.totalorder %s92, %s93
      %p104 = scmp.eq.s32.totalorder %s16, 0
      %p105 = por %p103, %p104
      %p106 = scmp.ne.s32.totalorder %s92, %s93
      %p107 = scmp.eq.s32.totalorder %s17, 1
      %p108 = por %p106, %p107
      %p110 = scmp.ne.s32.totalorder %s93, %s109
      %p111 = scmp.eq.s32.totalorder %s17, 0
      %p112 = por %p110, %p111
      %p113 = scmp.le.s32.totalorder 1, %s11
      %p114 = scmp.lt.s32.totalorder %s11, 3
      %p115 = pnand %p113, %p114
      %p116 = pneg %p115
      // Predicated region
      $region9: #{tpu_custom_call.1} parent=5 // pred_check
        _
      $region10: #{tpu_custom_call.1} parent=5 // pred_check_branch
        %118 = sbr.rel (%p115) target = $region12
      $region11: #{tpu_custom_call.1} parent=5 // pred_region
        %s119 = ssub.s32 %s11, 1
      $region12: #{tpu_custom_call.1} parent=5 // pred_fallthru
        _
      %p120 = scmp.lt.s32.totalorder %s11, 2
      // Predicated region
      $region13: #{tpu_custom_call.1} parent=5 // pred_check
        %p121 = pneg %p120
      $region14: #{tpu_custom_call.1} parent=5 // pred_check_branch
        %123 = sbr.rel (%p121) target = $region16
      $region15: #{tpu_custom_call.1} parent=5 // pred_region
        // Predicated region
        $region17: #{tpu_custom_call.1} parent=15 // pred_check
          %p124 = pneg %p45
        $region18: #{tpu_custom_call.1} parent=15 // pred_check_branch
          %126 = sbr.rel (%p124) target = $region20
        $region19: #{tpu_custom_call.1} parent=15 // pred_region
          %p127 = scmp.lt.s32.totalorder %s18, 1
          %s128 = scalar_select %p127, %s18, 1
          %p129 = scmp.lt.s32.totalorder %s19, 0
          %s130 = scalar_select %p129, %s19, 0
          %s131 = sadd.s32 %s130, %s128
          %s132 = smul.addr %s131, 4
          %s133 = scalar_lea.vmem %s0, %s132
        $region20: #{tpu_custom_call.1} parent=15 // pred_fallthru
          _
        // Predicated region
        $region21: #{tpu_custom_call.1} parent=15 // pred_check
          %p134 = pneg %p71
        $region22: #{tpu_custom_call.1} parent=15 // pred_check_branch
          %136 = sbr.rel (%p134) target = $region24
        $region23: #{tpu_custom_call.1} parent=15 // pred_region
          %p137 = scmp.lt.s32.totalorder %s18, 1
          %s138 = scalar_select %p137, %s18, 1
          %s139 = smul.addr %s138, 4
          %s140 = scalar_lea.vmem %s1, %s139
        $region24: #{tpu_custom_call.1} parent=15 // pred_fallthru
          _
      $region16: #{tpu_custom_call.1} parent=5 // pred_fallthru
        _
      %p141 = scmp.le.s32.totalorder 1, %s11
      %p142 = scmp.lt.s32.totalorder %s11, 3
      %p143 = pnand %p141, %p142
      %p144 = pneg %p143
      // Predicated region
      $region25: #{tpu_custom_call.1} parent=5 // pred_check
        _
      $region26: #{tpu_custom_call.1} parent=5 // pred_check_branch
        %146 = sbr.rel (%p143) target = $region28
      $region27: #{tpu_custom_call.1} parent=5 // pred_region
        %s147 = ssub.s32 %s11, 1
        %p148 = scmp.lt.s32.totalorder %s20, 1
        %s149 = scalar_select %p148, %s20, 1
        %p150 = scmp.lt.s32.totalorder %s21, 0
        %s151 = scalar_select %p150, %s21, 0
        %s152 = sadd.s32 %s151, %s149
        %s153 = smul.addr %s152, 4
        %s154 = scalar_lea.vmem %s0, %s153
        %p155 = pneg %p51
        %p156 = pneg %p48
        %p157 = scmp.lt.s32.totalorder %s20, 1
        %s158 = scalar_select %p157, %s20, 1
        %s159 = smul.addr %s158, 4
        %s160 = scalar_lea.vmem %s1, %s159
        %p161 = pneg %p77
        %p162 = pneg %p74
        %p163 = pneg %p105
        %p164 = pneg %p102
        %s165 = sand.u32 %s92, 1
        %s166 = scalar_lea.sflag [#allocation3], %s165
        %s167 = sand.u32 %s92, 1
        %s168 = smul.addr %s167, 64
        %s169 = scalar_lea.vmem [#allocation2], %s168
        %p170 = scmp.lt.s32.totalorder %s20, 1
        %s171 = scalar_select %p170, %s20, 1
        %p172 = scmp.lt.s32.totalorder %s21, 0
        %s173 = scalar_select %p172, %s21, 0
        %s174 = sadd.s32 %s173, %s171
        %s175 = smul.addr %s174, 4
        %s176 = scalar_lea.vmem %s0, %s175
        %p177 = scmp.lt.s32.totalorder %s20, 1
        %s178 = scalar_select %p177, %s20, 1
        %s179 = smul.addr %s178, 4
        %s180 = scalar_lea.vmem %s1, %s179
        %s181 = smul.u32 8, %s21
        %v182 = vld [vmem:[%s176] sm:$0x7]
        %v183 = vld [vmem:[%s180] sm:$0x7]
        %184 = vxpose.xlu0.b32.start [1/16] %v182, 128
        %185 = vxpose.xlu0.b32.cont [2/16] 0.0, 128
        %186 = vxpose.xlu0.b32.cont [3/16] 0.0, 128
        %187 = vxpose.xlu0.b32.cont [4/16] 0.0, 128
        %188 = vxpose.xlu0.b32.cont [5/16] 0.0, 128
        %189 = vxpose.xlu0.b32.cont [6/16] 0.0, 128
        %190 = vxpose.xlu0.b32.cont [7/16] 0.0, 128
        %191 = vxpose.xlu0.b32.cont [8/16] 0.0, 128
        %192 = vxpose.xlu0.b32.cont [9/16] 0.0, 128
        %193 = vxpose.xlu0.b32.cont [10/16] 0.0, 128
        %194 = vxpose.xlu0.b32.cont [11/16] 0.0, 128
        %195 = vxpose.xlu0.b32.cont [12/16] 0.0, 128
        %196 = vxpose.xlu0.b32.cont [13/16] 0.0, 128
        %197 = vxpose.xlu0.b32.cont [14/16] 0.0, 128
        %198 = vxpose.xlu0.b32.cont [15/16] 0.0, 128
        %199 = vxpose.xlu0.b32.end [16/16] 0.0, 128
        %v200 = vpop.trf.xlu0
        %v201 = vpop.trf.xlu0
        %v202 = vpop.trf.xlu0
        %v203 = vpop.trf.xlu0
        %v204 = vpop.trf.xlu0
        %v205 = vpop.trf.xlu0
        %v206 = vpop.trf.xlu0
        %v207 = vpop.trf.xlu0
        %v208 = vpop.trf.xlu0
        %v209 = vpop.trf.xlu0
        %v210 = vpop.trf.xlu0
        %v211 = vpop.trf.xlu0
        %v212 = vpop.trf.xlu0
        %v213 = vpop.trf.xlu0
        %v214 = vpop.trf.xlu0
        %v215 = vpop.trf.xlu0
        %vm216 = vcmask 23552
        %v218 = vsel %vm216, %v200, 0
        %v221 = vsel %vm216, %v201, 0
        %v224 = vsel %vm216, %v202, 0
        %v227 = vsel %vm216, %v203, 0
        %v230 = vsel %vm216, %v204, 0
        %v233 = vsel %vm216, %v205, 0
        %v236 = vsel %vm216, %v206, 0
        %v239 = vsel %vm216, %v207, 0
        %vm241 = vcmask 1042432
        %v243 = vsel %vm241, %v183, 0
        %245 = vmatprep.subr.mxu0 0.0
        %246 = vmatpush1.msra.mxu0 0.0
        %247 = vmatprep.subr.mxu0 0.0
        %248 = vmatpush1.msra.mxu0 0.0
        %249 = vmatprep.subr.mxu0 0.0
        %250 = vmatpush1.msra.mxu0 0.0
        %251 = vmatprep.subr.mxu0 0.0
        %252 = vmatpush1.msra.mxu0 0.0
        %253 = vmatprep.subr.mxu0 0.0
        %254 = vmatpush1.msra.mxu0 0.0
        %255 = vmatprep.subr.mxu0 0.0
        %256 = vmatpush1.msra.mxu0 0.0
        %257 = vmatprep.subr.mxu0 0.0
        %258 = vmatpush1.msra.mxu0 0.0
        %259 = vmatprep.subr.mxu0 0.0
        %260 = vmatpush1.msra.mxu0 0.0
        %261 = vmatprep.subr.mxu0 0.0
        %262 = vmatpush1.msra.mxu0 0.0
        %263 = vmatprep.subr.mxu0 0.0
        %264 = vmatpush1.msra.mxu0 0.0
        %265 = vmatprep.subr.mxu0 0.0
        %266 = vmatpush1.msra.mxu0 0.0
        %267 = vmatprep.subr.mxu0 0.0
        %268 = vmatpush1.msra.mxu0 0.0
        %269 = vmatprep.subr.mxu0 0.0
        %270 = vmatpush1.msra.mxu0 0.0
        %271 = vmatprep.subr.mxu0 0.0
        %272 = vmatpush1.msra.mxu0 0.0
        %273 = vmatprep.subr.mxu0 0.0
        %274 = vmatpush1.msra.mxu0 0.0
        %275 = vmatprep.subr.mxu0 0.0
        %276 = vmatpush1.msra.mxu0 %v243
        %277 = vmatprep.subr.mxu0 0.0
        %278 = vmatpush2.msra.mxu0 0.0
        %279 = vmatprep.subr.mxu0 0.0
        %280 = vmatpush2.msra.mxu0 0.0
        %281 = vmatprep.subr.mxu0 0.0
        %282 = vmatpush2.msra.mxu0 0.0
        %283 = vmatprep.subr.mxu0 0.0
        %284 = vmatpush2.msra.mxu0 0.0
        %285 = vmatprep.subr.mxu0 0.0
        %286 = vmatpush2.msra.mxu0 0.0
        %287 = vmatprep.subr.mxu0 0.0
        %288 = vmatpush2.msra.mxu0 0.0
        %289 = vmatprep.subr.mxu0 0.0
        %290 = vmatpush2.msra.mxu0 0.0
        %291 = vmatprep.subr.mxu0 0.0
        %292 = vmatpush2.msra.mxu0 0.0
        %293 = vmatprep.subr.mxu0 0.0
        %294 = vmatpush2.msra.mxu0 0.0
        %295 = vmatprep.subr.mxu0 0.0
        %296 = vmatpush2.msra.mxu0 0.0
        %297 = vmatprep.subr.mxu0 0.0
        %298 = vmatpush2.msra.mxu0 0.0
        %299 = vmatprep.subr.mxu0 0.0
        %300 = vmatpush2.msra.mxu0 0.0
        %301 = vmatprep.subr.mxu0 0.0
        %302 = vmatpush2.msra.mxu0 0.0
        %303 = vmatprep.subr.mxu0 0.0
        %304 = vmatpush2.msra.mxu0 0.0
        %305 = vmatprep.subr.mxu0 0.0
        %306 = vmatpush2.msra.mxu0 0.0
        %307 = vmatprep.subr.mxu0 0.0
        %308 = vmatpush2.msra.mxu0 0.0
        %309 = vmatprep.mubr.f32.mxu0 0.0
        %310 = vmatmul.mubr.f32.gmra.mxu0 %v218
        %v311 = vpop.f32.mrf.mxu0
        %v312 = vadd.f32 0.0, %v311
        %v313 = vpop.f32.mrf.mxu0
        %314 = vmatprep.mubr.f32.mxu0 0.0
        %315 = vmatmul.mubr.f32.gmra.mxu0 %v221
        %v316 = vpop.f32.mrf.mxu0
        %v317 = vadd.f32 0.0, %v316
        %v318 = vpop.f32.mrf.mxu0
        %319 = vmatprep.mubr.f32.mxu0 0.0
        %320 = vmatmul.mubr.f32.gmra.mxu0 %v224
        %v321 = vpop.f32.mrf.mxu0
        %v322 = vadd.f32 0.0, %v321
        %v323 = vpop.f32.mrf.mxu0
        %324 = vmatprep.mubr.f32.mxu0 0.0
        %325 = vmatmul.mubr.f32.gmra.mxu0 %v227
        %v326 = vpop.f32.mrf.mxu0
        %v327 = vadd.f32 0.0, %v326
        %v328 = vpop.f32.mrf.mxu0
        %329 = vmatprep.mubr.f32.mxu0 0.0
        %330 = vmatmul.mubr.f32.gmra.mxu0 %v230
        %v331 = vpop.f32.mrf.mxu0
        %v332 = vadd.f32 0.0, %v331
        %v333 = vpop.f32.mrf.mxu0
        %334 = vmatprep.mubr.f32.mxu0 0.0
        %335 = vmatmul.mubr.f32.gmra.mxu0 %v233
        %v336 = vpop.f32.mrf.mxu0
        %v337 = vadd.f32 0.0, %v336
        %v338 = vpop.f32.mrf.mxu0
        %339 = vmatprep.mubr.f32.mxu0 0.0
        %340 = vmatmul.mubr.f32.gmra.mxu0 %v236
        %v341 = vpop.f32.mrf.mxu0
        %v342 = vadd.f32 0.0, %v341
        %v343 = vpop.f32.mrf.mxu0
        %344 = vmatprep.mubr.f32.mxu0 0.0
        %345 = vmatmul.mubr.f32.gmra.mxu0 %v239
        %v346 = vpop.f32.mrf.mxu0
        %v347 = vadd.f32 0.0, %v346
        %v348 = vpop.f32.mrf.mxu0
        %349 = vdwg.mxu0
        %v350 = vmul.f32 %v182, %v182
        %351 = vxpose.xlu0.b32.start [1/16] %v350, 128
        %352 = vxpose.xlu0.b32.cont [2/16] 0.0, 128
        %353 = vxpose.xlu0.b32.cont [3/16] 0.0, 128
        %354 = vxpose.xlu0.b32.cont [4/16] 0.0, 128
        %355 = vxpose.xlu0.b32.cont [5/16] 0.0, 128
        %356 = vxpose.xlu0.b32.cont [6/16] 0.0, 128
        %357 = vxpose.xlu0.b32.cont [7/16] 0.0, 128
        %358 = vxpose.xlu0.b32.cont [8/16] 0.0, 128
        %359 = vxpose.xlu0.b32.cont [9/16] 0.0, 128
        %360 = vxpose.xlu0.b32.cont [10/16] 0.0, 128
        %361 = vxpose.xlu0.b32.cont [11/16] 0.0, 128
        %362 = vxpose.xlu0.b32.cont [12/16] 0.0, 128
        %363 = vxpose.xlu0.b32.cont [13/16] 0.0, 128
        %364 = vxpose.xlu0.b32.cont [14/16] 0.0, 128
        %365 = vxpose.xlu0.b32.cont [15/16] 0.0, 128
        %366 = vxpose.xlu0.b32.end [16/16] 0.0, 128
        %v367 = vpop.trf.xlu0
        %v368 = vpop.trf.xlu0
        %v369 = vpop.trf.xlu0
        %v370 = vpop.trf.xlu0
        %v371 = vpop.trf.xlu0
        %v372 = vpop.trf.xlu0
        %v373 = vpop.trf.xlu0
        %v374 = vpop.trf.xlu0
        %v375 = vpop.trf.xlu0
        %v376 = vpop.trf.xlu0
        %v377 = vpop.trf.xlu0
        %v378 = vpop.trf.xlu0
        %v379 = vpop.trf.xlu0
        %v380 = vpop.trf.xlu0
        %v381 = vpop.trf.xlu0
        %v382 = vpop.trf.xlu0
        %v384 = vsel %vm216, %v367, 0
        %v387 = vsel %vm216, %v368, 0
        %v390 = vsel %vm216, %v369, 0
        %v393 = vsel %vm216, %v370, 0
        %v396 = vsel %vm216, %v371, 0
        %v399 = vsel %vm216, %v372, 0
        %v402 = vsel %vm216, %v373, 0
        %v405 = vsel %vm216, %v374, 0
        %v408 = vsel %vm241, 1.0, 0
        %410 = vmatprep.subr.mxu0 0.0
        %411 = vmatpush1.msra.mxu0 0.0
        %412 = vmatprep.subr.mxu0 0.0
        %413 = vmatpush1.msra.mxu0 0.0
        %414 = vmatprep.subr.mxu0 0.0
        %415 = vmatpush1.msra.mxu0 0.0
        %416 = vmatprep.subr.mxu0 0.0
        %417 = vmatpush1.msra.mxu0 0.0
        %418 = vmatprep.subr.mxu0 0.0
        %419 = vmatpush1.msra.mxu0 0.0
        %420 = vmatprep.subr.mxu0 0.0
        %421 = vmatpush1.msra.mxu0 0.0
        %422 = vmatprep.subr.mxu0 0.0
        %423 = vmatpush1.msra.mxu0 0.0
        %424 = vmatprep.subr.mxu0 0.0
        %425 = vmatpush1.msra.mxu0 0.0
        %426 = vmatprep.subr.mxu0 0.0
        %427 = vmatpush1.msra.mxu0 0.0
        %428 = vmatprep.subr.mxu0 0.0
        %429 = vmatpush1.msra.mxu0 0.0
        %430 = vmatprep.subr.mxu0 0.0
        %431 = vmatpush1.msra.mxu0 0.0
        %432 = vmatprep.subr.mxu0 0.0
        %433 = vmatpush1.msra.mxu0 0.0
        %434 = vmatprep.subr.mxu0 0.0
        %435 = vmatpush1.msra.mxu0 0.0
        %436 = vmatprep.subr.mxu0 0.0
        %437 = vmatpush1.msra.mxu0 0.0
        %438 = vmatprep.subr.mxu0 0.0
        %439 = vmatpush1.msra.mxu0 0.0
        %440 = vmatprep.subr.mxu0 0.0
        %441 = vmatpush1.msra.mxu0 %v408
        %442 = vmatprep.subr.mxu0 0.0
        %443 = vmatpush2.msra.mxu0 0.0
        %444 = vmatprep.subr.mxu0 0.0
        %445 = vmatpush2.msra.mxu0 0.0
        %446 = vmatprep.subr.mxu0 0.0
        %447 = vmatpush2.msra.mxu0 0.0
        %448 = vmatprep.subr.mxu0 0.0
        %449 = vmatpush2.msra.mxu0 0.0
        %450 = vmatprep.subr.mxu0 0.0
        %451 = vmatpush2.msra.mxu0 0.0
        %452 = vmatprep.subr.mxu0 0.0
        %453 = vmatpush2.msra.mxu0 0.0
        %454 = vmatprep.subr.mxu0 0.0
        %455 = vmatpush2.msra.mxu0 0.0
        %456 = vmatprep.subr.mxu0 0.0
        %457 = vmatpush2.msra.mxu0 0.0
        %458 = vmatprep.subr.mxu0 0.0
        %459 = vmatpush2.msra.mxu0 0.0
        %460 = vmatprep.subr.mxu0 0.0
        %461 = vmatpush2.msra.mxu0 0.0
        %462 = vmatprep.subr.mxu0 0.0
        %463 = vmatpush2.msra.mxu0 0.0
        %464 = vmatprep.subr.mxu0 0.0
        %465 = vmatpush2.msra.mxu0 0.0
        %466 = vmatprep.subr.mxu0 0.0
        %467 = vmatpush2.msra.mxu0 0.0
        %468 = vmatprep.subr.mxu0 0.0
        %469 = vmatpush2.msra.mxu0 0.0
        %470 = vmatprep.subr.mxu0 0.0
        %471 = vmatpush2.msra.mxu0 0.0
        %472 = vmatprep.subr.mxu0 0.0
        %473 = vmatpush2.msra.mxu0 0.0
        %474 = vmatprep.mubr.f32.mxu0 0.0
        %475 = vmatmul.mubr.f32.gmra.mxu0 %v384
        %v476 = vpop.f32.mrf.mxu0
        %v477 = vadd.f32 0.0, %v476
        %v478 = vpop.f32.mrf.mxu0
        %479 = vmatprep.mubr.f32.mxu0 0.0
        %480 = vmatmul.mubr.f32.gmra.mxu0 %v387
        %v481 = vpop.f32.mrf.mxu0
        %v482 = vadd.f32 0.0, %v481
        %v483 = vpop.f32.mrf.mxu0
        %484 = vmatprep.mubr.f32.mxu0 0.0
        %485 = vmatmul.mubr.f32.gmra.mxu0 %v390
        %v486 = vpop.f32.mrf.mxu0
        %v487 = vadd.f32 0.0, %v486
        %v488 = vpop.f32.mrf.mxu0
        %489 = vmatprep.mubr.f32.mxu0 0.0
        %490 = vmatmul.mubr.f32.gmra.mxu0 %v393
        %v491 = vpop.f32.mrf.mxu0
        %v492 = vadd.f32 0.0, %v491
        %v493 = vpop.f32.mrf.mxu0
        %494 = vmatprep.mubr.f32.mxu0 0.0
        %495 = vmatmul.mubr.f32.gmra.mxu0 %v396
        %v496 = vpop.f32.mrf.mxu0
        %v497 = vadd.f32 0.0, %v496
        %v498 = vpop.f32.mrf.mxu0
        %499 = vmatprep.mubr.f32.mxu0 0.0
        %500 = vmatmul.mubr.f32.gmra.mxu0 %v399
        %v501 = vpop.f32.mrf.mxu0
        %v502 = vadd.f32 0.0, %v501
        %v503 = vpop.f32.mrf.mxu0
        %504 = vmatprep.mubr.f32.mxu0 0.0
        %505 = vmatmul.mubr.f32.gmra.mxu0 %v402
        %v506 = vpop.f32.mrf.mxu0
        %v507 = vadd.f32 0.0, %v506
        %v508 = vpop.f32.mrf.mxu0
        %509 = vmatprep.mubr.f32.mxu0 0.0
        %510 = vmatmul.mubr.f32.gmra.mxu0 %v405
        %v511 = vpop.f32.mrf.mxu0
        %v512 = vadd.f32 0.0, %v511
        %v513 = vpop.f32.mrf.mxu0
        %514 = vdwg.mxu0
        %v515 = vmul.f32 %v183, %v183
        %vm516 = vcmask 518144
        %v517 = vsel %vm516, %v515, 0.0
        %v518 = vrot.slane %v517, 4
        %v519 = vadd.f32 %v517, %v518
        %v520 = vrot.slane %v519, 2
        %v521 = vadd.f32 %v519, %v520
        %v522 = vrot.slane %v521, 1
        %v523 = vadd.f32 %v521, %v522
        %v524 = vmul.f32 %v312, -2.0
        %v525 = vmul.f32 %v317, -2.0
        %v526 = vmul.f32 %v322, -2.0
        %v527 = vmul.f32 %v327, -2.0
        %v528 = vmul.f32 %v332, -2.0
        %v529 = vmul.f32 %v337, -2.0
        %v530 = vmul.f32 %v342, -2.0
        %v531 = vmul.f32 %v347, -2.0
        %533 = vset.pattern.permute.xlu0 0
        %534 = vperm.xlu0 %533, %v477
        %v535 = vpop.permute.xlu0 %534
        %538 = vset.pattern.permute.xlu0 0
        %539 = vperm.xlu0 %538, %v482
        %v540 = vpop.permute.xlu0 %539
        %543 = vset.pattern.permute.xlu0 0
        %544 = vperm.xlu0 %543, %v487
        %v545 = vpop.permute.xlu0 %544
        %548 = vset.pattern.permute.xlu0 0
        %549 = vperm.xlu0 %548, %v492
        %v550 = vpop.permute.xlu0 %549
        %553 = vset.pattern.permute.xlu0 0
        %554 = vperm.xlu0 %553, %v497
        %v555 = vpop.permute.xlu0 %554
        %558 = vset.pattern.permute.xlu0 0
        %559 = vperm.xlu0 %558, %v502
        %v560 = vpop.permute.xlu0 %559
        %563 = vset.pattern.permute.xlu0 0
        %564 = vperm.xlu0 %563, %v507
        %v565 = vpop.permute.xlu0 %564
        %568 = vset.pattern.permute.xlu0 0
        %569 = vperm.xlu0 %568, %v512
        %v570 = vpop.permute.xlu0 %569
        %v572 = vadd.f32 %v524, %v535
        %v573 = vadd.f32 %v525, %v540
        %v574 = vadd.f32 %v526, %v545
        %v575 = vadd.f32 %v527, %v550
        %v576 = vadd.f32 %v528, %v555
        %v577 = vadd.f32 %v529, %v560
        %v578 = vadd.f32 %v530, %v565
        %v579 = vadd.f32 %v531, %v570
        %v580 = vadd.f32 %v572, %v523
        %v581 = vadd.f32 %v573, %v523
        %v582 = vadd.f32 %v574, %v523
        %v583 = vadd.f32 %v575, %v523
        %v584 = vadd.f32 %v576, %v523
        %v585 = vadd.f32 %v577, %v523
        %v586 = vadd.f32 %v578, %v523
        %v587 = vadd.f32 %v579, %v523
        %vm588 = vcmask 523264
        %589 = vst.msk [vmem:[%s169] sm:$0xff] %vm588, %v580
        %590 = vst.msk [vmem:[%s169 + $0x8] sm:$0xff] %vm588, %v581
        %591 = vst.msk [vmem:[%s169 + $0x10] sm:$0xff] %vm588, %v582
        %592 = vst.msk [vmem:[%s169 + $0x18] sm:$0xff] %vm588, %v583
        %593 = vst.msk [vmem:[%s169 + $0x20] sm:$0xff] %vm588, %v584
        %594 = vst.msk [vmem:[%s169 + $0x28] sm:$0xff] %vm588, %v585
        %595 = vst.msk [vmem:[%s169 + $0x30] sm:$0xff] %vm588, %v586
        %596 = vst.msk [vmem:[%s169 + $0x38] sm:$0xff] %vm588, %v587
        %s597 = sand.u32 %s92, 1
        %s598 = scalar_lea.sflag [#allocation3], %s597
        %s599 = sand.u32 %s92, 1
        %s600 = smul.addr %s599, 64
        %s601 = scalar_lea.vmem [#allocation2], %s600
        // Predicated region
        $region29: #{tpu_custom_call.1} parent=27 // pred_check
          %p602 = pneg %p102
        $region30: #{tpu_custom_call.1} parent=27 // pred_check_branch
          %604 = sbr.rel (%p602) target = $region32
        $region31: #{tpu_custom_call.1} parent=27 // pred_region
          %s605 = smul.u32 8, %s21
          %s607 = ssub.s32 1024, 1024
          %608 = vsyncadd %s598, %s607
          %s609 = smul.addr %s20, 8
          %s610 = sadd.s32 %s605, %s609
          %s611 = smul.addr %s610, 128
          %s612 = scalar_lea.hbm %s2, %s611
          %s613 = sshll.u32 %s601, 4
          %s614 = int_to_ptr.vmem [resolvable:$true] %s613
          %619 = dma.vmem_to_hbm [thread:$0]  %s614, 1024, %s612, %s598, 128, 128, 8
        $region32: #{tpu_custom_call.1} parent=27 // pred_fallthru
          _
      $region28: #{tpu_custom_call.1} parent=5 // pred_fallthru
        _
      %p620 = scmp.le.s32.totalorder 2, %s11
      // Predicated region
      $region33: #{tpu_custom_call.1} parent=5 // pred_check
        %p621 = pneg %p620
      $region34: #{tpu_custom_call.1} parent=5 // pred_check_branch
        %623 = sbr.rel (%p621) target = $region36
      $region35: #{tpu_custom_call.1} parent=5 // pred_region
        %s624 = ssub.s32 %s11, 2
        // Predicated region
        $region37: #{tpu_custom_call.1} parent=35 // pred_check
          %p625 = pneg %p108
        $region38: #{tpu_custom_call.1} parent=35 // pred_check_branch
          %627 = sbr.rel (%p625) target = $region40
        $region39: #{tpu_custom_call.1} parent=35 // pred_region
          %s628 = sand.u32 %s93, 1
          %s629 = scalar_lea.sflag [#allocation3], %s628
          %s630 = sand.u32 %s93, 1
          %s631 = smul.addr %s630, 64
          %s632 = scalar_lea.vmem [#allocation2], %s631
          %633 = dma.done %s629, 1024
        $region40: #{tpu_custom_call.1} parent=35 // pred_fallthru
          _
      $region36: #{tpu_custom_call.1} parent=5 // pred_fallthru
        _
    $region6: #{tpu_custom_call.1} parent=1 // loop_footer
      %s15 = sadd.s32 1, %s11
    $region7: #{tpu_custom_call.1} parent=1 // loop_footer_branch
      %10 = sbr.rel target = $region3
    $region8: #{tpu_custom_call.1} parent=1 // loop_exit
      _
    %634 = vsyncpa [#allocation3], 1
    %s635 = scalar_lea.sflag [#allocation3], 1
    %636 = vsyncpa %s635, 1

</llo_original>
